<compile_context>
chip_gen: v7x
topology: tpu7x:2x2x1
jax: 0.10.0
libtpu: 0.0.40
codegen_flags: <defaults>
</compile_context>

<pallas_src>
import functools

import jax
import jax.numpy as jnp
from jax import lax
from jax.experimental import pallas as pl
from jax.experimental.pallas import tpu as pltpu

EPS = 1e-10
LANES = 128            # lane (fast) axis width
MAX_TILE_R = 8192      # rows per grid step: 8192 x 128 f32 = 4 MiB per input block
SPLIT_MIN_TILE_R = 256 # if a single-block launch would have >= 2*this rows, split in 2


def _bpr_partial_kernel(pos_ref, neg_ref, out_ref, *,
                        tile_r, full_rows, lane_rem, needs_mask):
    # Hot path: diff -> sigmoid -> -log(sig + eps) (exact reference formula).
    # sigmoid(x) = 0.5*(tanh(x/2)+1): one EUP transcendental instead of
    # exp + divide; matches the exp form to float32 rounding and keeps the
    # eps clamp behaviour for very negative diffs.
    diff = pos_ref[...].astype(jnp.float32) - neg_ref[...].astype(jnp.float32)
    sig = 0.5 * (jnp.tanh(0.5 * diff) + 1.0)
    loss = -jnp.log(sig + EPS)

    def _store(x):
        # Reduce down to one vreg-shaped (8,128) partial.  Two-level sum for
        # large tiles gives the scheduler 8 independent add chains instead of
        # one tile_r//8-long carried chain.  The reshapes split only the
        # leading (sublane-major) dim, so they are layout-preserving.
        if tile_r % 64 == 0 and tile_r > 64:
            p = x.reshape(tile_r // 64, 64, LANES).sum(axis=0)   # (64, 128)
            out_ref[...] = p.reshape(8, 8, LANES).sum(axis=0)    # (8, 128)
        else:
            out_ref[...] = x.reshape(tile_r // 8, 8, LANES).sum(axis=0)

    if not needs_mask:
        # Static python branch: no padding / ragged tail exists anywhere.
        _store(loss)
    else:
        # Only the LAST grid step can contain padded or out-of-bounds rows
        # (guaranteed by the wrapper); interior tiles skip the mask entirely.
        i = pl.program_id(0)
        last = pl.num_programs(0) - 1

        @pl.when(i != last)
        def _():
            _store(loss)

        @pl.when(i == last)
        def _():
            row = i * tile_r + lax.broadcasted_iota(jnp.int32, (tile_r, LANES), 0)
            if lane_rem == 0:
                mask = row < full_rows                       # row-only compare
            else:
                lane = lax.broadcasted_iota(jnp.int32, (tile_r, LANES), 1)
                mask = (row < full_rows) | ((row == full_rows) & (lane < lane_rem))
            # Must be a select (NOT a multiply) applied BEFORE the reduce:
            # out-of-bounds block data is unspecified and may be NaN/Inf.
            _store(jnp.where(mask, loss, 0.0))


def bpr_loss(pos_scores, neg_scores, *, max_tile_r=MAX_TILE_R):
    """Pallas BPR loss: mean(-log(sigmoid(pos - neg) + 1e-10)). Returns f32 scalar."""
    assert pos_scores.shape == neg_scores.shape
    n = pos_scores.size
    assert n > 0

    pos_flat = pos_scores.reshape(-1)
    neg_flat = neg_scores.reshape(-1)

    # Lane-major layout: (rows8, 128), rows8 sublane-aligned.
    rows = -(-n // LANES)            # ceil(n / 128)
    rows8 = -(-rows // 8) * 8        # round up to a multiple of 8
    padded_n = rows8 * LANES         # <= n + 1023

    if padded_n != n:
        # Only case that still copies the inputs; the pad is <= 1023 elements
        # and any n that is already a multiple of 1024 never pads.
        pad = padded_n - n
        pos_flat = jnp.pad(pos_flat, (0, pad))
        neg_flat = jnp.pad(neg_flat, (0, pad))

    pos2d = pos_flat.reshape(rows8, LANES)
    neg2d = neg_flat.reshape(rows8, LANES)

    # --- tile selection ------------------------------------------------------
    max_tile_r = max(8, (max_tile_r // 8) * 8)
    if rows8 > max_tile_r:
        tile_r = max_tile_r                 # big input: stream in max-size tiles
    elif rows8 >= 2 * SPLIT_MIN_TILE_R:
        # Mid-size input: split into 2 tiles so the "parallel" grid axis can
        # shard across v7x's two TensorCores (one extra ~0.35us step elsewhere).
        tile_r = -(-(rows8 // 2) // 8) * 8
    else:
        tile_r = rows8                      # small input: single-block launch
    n_tiles = -(-rows8 // tile_r)
    # Mask needed iff the grid covers more elements than the true count
    # (sub-128 tail pad and/or ragged last block).
    needs_mask = (n_tiles * tile_r * LANES) != n

    kernel = functools.partial(
        _bpr_partial_kernel,
        tile_r=tile_r,
        full_rows=n // LANES,
        lane_rem=n % LANES,
        needs_mask=needs_mask)

    partials = pl.pallas_call(
        kernel,
        out_shape=jax.ShapeDtypeStruct((n_tiles * 8, LANES), jnp.float32),
        grid=(n_tiles,),
        in_specs=[
            pl.BlockSpec((tile_r, LANES), lambda i: (i, 0)),
            pl.BlockSpec((tile_r, LANES), lambda i: (i, 0)),
        ],
        out_specs=pl.BlockSpec((8, LANES), lambda i: (i, 0)),
        compiler_params=pltpu.CompilerParams(
            dimension_semantics=("parallel",),
            vmem_limit_bytes=32 * 1024 * 1024),
    )(pos2d, neg2d)

    # Tiny final reduce + mean over the TRUE element count (torch squeeze(mean)).
    return jnp.sum(partials) / jnp.float32(n)


def _reference(pos_scores, neg_scores):
    x = pos_scores.astype(jnp.float32) - neg_scores.astype(jnp.float32)
    return jnp.mean(-jnp.log(jax.nn.sigmoid(x) + EPS))


if __name__ == "__main__":
    key = jax.random.PRNGKey(0)
    k1, k2, k3, k4, k5, k6 = jax.random.split(key, 6)

    # Case 1: batch of 4096 (pos, neg) score pairs -> single-block launch.
    pos = jax.random.normal(k1, (4096,), dtype=jnp.float32)
    neg = jax.random.normal(k2, (4096,), dtype=jnp.float32)
    loss = jax.block_until_ready(bpr_loss(pos, neg))
    ref = jax.block_until_ready(_reference(pos, neg))
    assert loss.shape == ()
    assert jnp.allclose(loss, ref, rtol=1e-5, atol=1e-5), (loss, ref)

    # Case 2: 2-D scores, odd total size (3000) -> exercises the <=1023-elem
    # pad + masked last tile.
    pos_o = jax.random.normal(k3, (60, 50), dtype=jnp.float32)
    neg_o = jax.random.normal(k4, (60, 50), dtype=jnp.float32)
    loss_o = jax.block_until_ready(bpr_loss(pos_o, neg_o))
    ref_o = jax.block_until_ready(_reference(pos_o, neg_o))
    assert jnp.allclose(loss_o, ref_o, rtol=1e-5, atol=1e-5), (loss_o, ref_o)

    # Case 2b: same odd size with tiny tiles -> multi-tile grid where only the
    # LAST step runs the pl.when mask branch.
    loss_o2 = jax.block_until_ready(bpr_loss(pos_o, neg_o, max_tile_r=8))
    assert jnp.allclose(loss_o2, ref_o, rtol=1e-5, atol=1e-5), (loss_o2, ref_o)

    # Case 3: force multiple unmasked grid steps (small tile, aligned size).
    loss_m = jax.block_until_ready(bpr_loss(pos, neg, max_tile_r=8))
    assert jnp.allclose(loss_m, ref, rtol=1e-5, atol=1e-5), (loss_m, ref)

    # Case 4: bf16 inputs (half the HBM read traffic), upcast inside kernel.
    pos_b = pos.astype(jnp.bfloat16)
    neg_b = neg.astype(jnp.bfloat16)
    loss_b = jax.block_until_ready(bpr_loss(pos_b, neg_b))
    ref_b = jax.block_until_ready(_reference(pos_b, neg_b))
    assert jnp.allclose(loss_b, ref_b, rtol=1e-5, atol=1e-5), (loss_b, ref_b)

    # Case 5: mid-size ragged input (70000) -> two-TC split path (2 tiles),
    # ragged last block + tail mask, no tile-multiple padding.
    pos_s = jax.random.normal(k5, (70000,), dtype=jnp.float32)
    neg_s = jax.random.normal(k6, (70000,), dtype=jnp.float32)
    loss_s = jax.block_until_ready(bpr_loss(pos_s, neg_s))
    ref_s = jax.block_until_ready(_reference(pos_s, neg_s))
    assert jnp.allclose(loss_s, ref_s, rtol=1e-5, atol=1e-5), (loss_s, ref_s)

    print("KERNEL_OK")
</pallas_src>

<mosaic_0001>
module attributes {stable_mosaic.version = 11 : i64} {
  func.func @_bpr_partial_kernel(%arg0: i32, %arg1: memref<32x128xf32, #tpu.memory_space<vmem>>, %arg2: memref<32x128xf32, #tpu.memory_space<vmem>>, %arg3: memref<8x128xf32, #tpu.memory_space<vmem>>) attributes {dimension_semantics = [#tpu.dimension_semantics<parallel>], iteration_bounds = array<i64: 1>, scalar_prefetch = 0 : i64, scratch_operands = 0 : i64, tpu.core_type = #tpu.core_type<tc>, window_params = [{transform_indices = @transform_0, window_bounds = array<i64: 32, 128>}, {transform_indices = @transform_1, window_bounds = array<i64: 32, 128>}, {transform_indices = @transform_2, window_bounds = array<i64: 8, 128>}]} {
    %c0 = arith.constant 0 : index
    %c0_0 = arith.constant 0 : index
    %0 = vector.load %arg1[%c0, %c0_0] : memref<32x128xf32, #tpu.memory_space<vmem>>, vector<32x128xf32>
    %c0_1 = arith.constant 0 : index
    %c0_2 = arith.constant 0 : index
    %1 = vector.load %arg2[%c0_1, %c0_2] : memref<32x128xf32, #tpu.memory_space<vmem>>, vector<32x128xf32>
    %2 = arith.subf %0, %1 : vector<32x128xf32>
    %cst = arith.constant 5.000000e-01 : f32
    %3 = vector.broadcast %cst : f32 to vector<32x128xf32>
    %4 = arith.mulf %3, %2 : vector<32x128xf32>
    %5 = math.tanh %4 : vector<32x128xf32>
    %cst_3 = arith.constant 1.000000e+00 : f32
    %6 = vector.broadcast %cst_3 : f32 to vector<32x128xf32>
    %7 = arith.addf %5, %6 : vector<32x128xf32>
    %cst_4 = arith.constant 5.000000e-01 : f32
    %8 = vector.broadcast %cst_4 : f32 to vector<32x128xf32>
    %9 = arith.mulf %8, %7 : vector<32x128xf32>
    %cst_5 = arith.constant 1.000000e-10 : f32
    %10 = vector.broadcast %cst_5 : f32 to vector<32x128xf32>
    %11 = arith.addf %9, %10 : vector<32x128xf32>
    %12 = math.log %11 : vector<32x128xf32>
    %cst_6 = arith.constant 0.000000e+00 : f32
    %13 = vector.broadcast %cst_6 : f32 to vector<32x128xf32>
    %14 = arith.subf %13, %12 : vector<32x128xf32>
    %15 = vector.shape_cast %14 : vector<32x128xf32> to vector<4x8x128xf32>
    %cst_7 = arith.constant dense<0.000000e+00> : vector<8x128xf32>
    %16 = vector.multi_reduction <add>, %15, %cst_7 [0] : vector<4x8x128xf32> to vector<8x128xf32>
    %c0_8 = arith.constant 0 : index
    %c0_9 = arith.constant 0 : index
    %17 = vector.load %arg3[%c0_8, %c0_9] : memref<8x128xf32, #tpu.memory_space<vmem>>, vector<8x128xf32>
    tpu.vector_store %arg3[%c0_8, %c0_9], %16 {strides = array<i32>} : memref<8x128xf32, #tpu.memory_space<vmem>>, vector<8x128xf32>,
    return
  }
  func.func @transform_0(%arg0: i32) -> (i32, i32) {
    %c0_i32 = arith.constant 0 : i32
    %c0_i32_0 = arith.constant 0 : i32
    return %arg0, %c0_i32 : i32, i32
  }
  func.func @transform_1(%arg0: i32) -> (i32, i32) {
    %c0_i32 = arith.constant 0 : i32
    %c0_i32_0 = arith.constant 0 : i32
    return %arg0, %c0_i32 : i32, i32
  }
  func.func @transform_2(%arg0: i32) -> (i32, i32) {
    %c0_i32 = arith.constant 0 : i32
    %c0_i32_0 = arith.constant 0 : i32
    return %arg0, %c0_i32 : i32, i32
  }
}

</mosaic_0001>

<llo_original>
// kernel: tpu_custom_call.1
$region0: #{tpu_custom_call.1}
  #allocation0 [shape = 'u32[]', space=smem, size = 0x4, offset = 0x4, fixed_abs, tag = 'smem constant byte address 0x4 - core index']
  #allocation1 [shape = 'u32[144,128]{1,0:T(1,128)}', space=vmem, size = 0x12000, scoped, tag = 'internal scratch']
  %s0 = inlined_call_operand.hbm [shape: f32[32,128], index: 0, kind: input, shape index: {}]
  %s1 = inlined_call_operand.hbm [shape: f32[32,128], index: 1, kind: input, shape index: {}]
  %s2 = inlined_call_operand.hbm [shape: f32[8,128], index: 2, kind: output, shape index: {}]
  %s3 = sld [smem:[#allocation0]]
  $region26: #{tpu_custom_call.1} parent=0
    _
  %s5 = ssub.s32 1, %s3
  %s6 = scalar_select 0, %s5, %s3
  $region1: #{tpu_custom_call.1} parent=0
    #allocation2 [shape = 'u8[16384]{0}', space=vmem, size = 0x4000, scoped, tag = 'input window, operand 0, single buffered']
    #allocation3 [shape = 's32[1]{0}', space=sflag, size = 0x4, scoped, tag = 'scoped memory for tpu_custom_call.1']
    #allocation4 [shape = 's32[1]{0}', space=sflag, size = 0x4, scoped, tag = 'scoped memory for tpu_custom_call.1']
    #allocation5 [shape = 'u8[16384]{0}', space=vmem, size = 0x4000, scoped, tag = 'input window, operand 1, single buffered']
    #allocation6 [shape = 's32[1]{0}', space=sflag, size = 0x4, scoped, tag = 'scoped memory for tpu_custom_call.1']
    #allocation7 [shape = 'u8[4096]{0}', space=vmem, size = 0x1000, scoped, tag = 'output window, operand 0, single buffered']
    %7 = vsyncpa [#allocation3], 0
    %8 = vsyncpa [#allocation6], 0
    %9 = vsyncpa [#allocation4], 0
    // Predicated region
    $region2: #{tpu_custom_call.1} parent=1 // pred_check
      _
    $region3: #{tpu_custom_call.1} parent=1 // pred_check_branch
      %11 = sbr.rel (0) target = $region5
    $region4: #{tpu_custom_call.1} parent=1 // pred_region
      %s13 = ssub.s32 512, 512
      %14 = vsyncadd [#allocation3], %s13
      %s15 = sshll.u32 [#allocation2], 4
      %s16 = int_to_ptr.vmem [resolvable:$true] %s15
      %21 = dma.hbm_to_vmem [thread:$0]  %s0, 512, %s16, [#allocation3], 128, 128, 8
    $region5: #{tpu_custom_call.1} parent=1 // pred_fallthru
      _
    // Predicated region
    $region6: #{tpu_custom_call.1} parent=1 // pred_check
      _
    $region7: #{tpu_custom_call.1} parent=1 // pred_check_branch
      %23 = sbr.rel (0) target = $region9
    $region8: #{tpu_custom_call.1} parent=1 // pred_region
      %s25 = ssub.s32 512, 512
      %26 = vsyncadd [#allocation6], %s25
      %s27 = sshll.u32 [#allocation5], 4
      %s28 = int_to_ptr.vmem [resolvable:$true] %s27
      %33 = dma.hbm_to_vmem [thread:$0]  %s1, 512, %s28, [#allocation6], 128, 128, 8
    $region9: #{tpu_custom_call.1} parent=1 // pred_fallthru
      _
    // Predicated region
    $region10: #{tpu_custom_call.1} parent=1 // pred_check
      _
    $region11: #{tpu_custom_call.1} parent=1 // pred_check_branch
      %35 = sbr.rel (0) target = $region13
    $region12: #{tpu_custom_call.1} parent=1 // pred_region
      %36 = dma.done [#allocation3], 512
    $region13: #{tpu_custom_call.1} parent=1 // pred_fallthru
      _
    // Predicated region
    $region14: #{tpu_custom_call.1} parent=1 // pred_check
      _
    $region15: #{tpu_custom_call.1} parent=1 // pred_check_branch
      %38 = sbr.rel (0) target = $region17
    $region16: #{tpu_custom_call.1} parent=1 // pred_region
      %39 = dma.done [#allocation6], 512
    $region17: #{tpu_custom_call.1} parent=1 // pred_fallthru
      _
    %v40 = vld [vmem:[#allocation2] sm:$0xff]
    %v41 = vld [vmem:[#allocation2 + $0x8] sm:$0xff]
    %v42 = vld [vmem:[#allocation2 + $0x10] sm:$0xff]
    %v43 = vld [vmem:[#allocation2 + $0x18] sm:$0xff]
    %v44 = vld [vmem:[#allocation5] sm:$0xff]
    %v45 = vld [vmem:[#allocation5 + $0x8] sm:$0xff]
    %v46 = vld [vmem:[#allocation5 + $0x10] sm:$0xff]
    %v47 = vld [vmem:[#allocation5 + $0x18] sm:$0xff]
    %v48 = vsub.f32 %v40, %v44
    %v49 = vsub.f32 %v41, %v45
    %v50 = vsub.f32 %v42, %v46
    %v51 = vsub.f32 %v43, %v47
    %v52 = vmul.f32 %v48, 0.5
    %v53 = vmul.f32 %v49, 0.5
    %v54 = vmul.f32 %v50, 0.5
    %v55 = vmul.f32 %v51, 0.5
    %v56 = vtanh.pop %v52
    %v57 = vtanh.pop %v53
    %v58 = vtanh.pop %v54
    %v59 = vtanh.pop %v55
    %v60 = vadd.f32 %v56, 1.0
    %v61 = vadd.f32 %v57, 1.0
    %v62 = vadd.f32 %v58, 1.0
    %v63 = vadd.f32 %v59, 1.0
    %v64 = vmul.f32 %v60, 0.5
    %v65 = vmul.f32 %v61, 0.5
    %v66 = vmul.f32 %v62, 0.5
    %v67 = vmul.f32 %v63, 0.5
    %v68 = vadd.f32 %v64, 1e-10
    %v69 = vadd.f32 %v65, 1e-10
    %v70 = vadd.f32 %v66, 1e-10
    %v71 = vadd.f32 %v67, 1e-10
    %v72 = vlog2.pop %v68
    %v73 = vmul.f32 %v72, 0.6931472
    %v74 = vlog2.pop %v69
    %v75 = vmul.f32 %v74, 0.6931472
    %v76 = vlog2.pop %v70
    %v77 = vmul.f32 %v76, 0.6931472
    %v78 = vlog2.pop %v71
    %v79 = vmul.f32 %v78, 0.6931472
    %v80 = vsub.f32 0.0, %v73
    %v81 = vsub.f32 0.0, %v75
    %v82 = vsub.f32 0.0, %v77
    %v83 = vsub.f32 0.0, %v79
    %v84 = vadd.f32 %v80, %v81
    %v85 = vadd.f32 %v84, %v82
    %v86 = vadd.f32 %v85, %v83
    %87 = vst [vmem:[#allocation7] sm:$0xff] %v86
    // Predicated region
    $region18: #{tpu_custom_call.1} parent=1 // pred_check
      _
    $region19: #{tpu_custom_call.1} parent=1 // pred_check_branch
      %89 = sbr.rel (0) target = $region21
    $region20: #{tpu_custom_call.1} parent=1 // pred_region
      %s91 = ssub.s32 128, 128
      %92 = vsyncadd [#allocation4], %s91
      %s94 = sshll.u32 [#allocation7], 4
      %s95 = int_to_ptr.vmem [resolvable:$true] %s94
      %97 = dma.vmem_to_hbm [thread:$0]  %s95, 128, %s2, [#allocation4]
    $region21: #{tpu_custom_call.1} parent=1 // pred_fallthru
      _
    // Predicated region
    $region22: #{tpu_custom_call.1} parent=1 // pred_check
      _
    $region23: #{tpu_custom_call.1} parent=1 // pred_check_branch
      %99 = sbr.rel (0) target = $region25
    $region24: #{tpu_custom_call.1} parent=1 // pred_region
      %100 = dma.done [#allocation4], 128
    $region25: #{tpu_custom_call.1} parent=1 // pred_fallthru
      _
    %101 = vsyncpa [#allocation3], 1
    %102 = vsyncpa [#allocation6], 1
    %103 = vsyncpa [#allocation4], 1

</llo_original>
